<compile_context>
chip_gen: v6e
topology: v6e:2x2x1
jax: 0.10.0
libtpu: 0.0.40
codegen_flags: <defaults>
</compile_context>

<pallas_src>
import functools

import jax
import jax.numpy as jnp
from jax.experimental import pallas as pl
from jax.experimental.pallas import tpu as pltpu

ALPHA = 1.0
GAMMA = 2.0  # statically 2 -> explicit square inside the kernel
EPS = 1e-8


def _focal_loss_kernel(x_ref, t_ref, o_ref, *, n_valid, n_classes, tile_n):
    # x_ref: (TN, C) logits (f32 or bf16), t_ref: (TN, 1) int32 targets,
    # o_ref: (8, 128) f32 lane-dense partial-sum block for this tile.
    pid = pl.program_id(0)

    t = t_ref[...]                                     # (TN, 1) int32
    x = x_ref[...]                                     # (TN, C) in source dtype

    # Numerically stable log-softmax pieces along the class axis (axis=1).
    # Cast per-pass so bf16 inputs never keep a resident f32 copy of the tile.
    m = jnp.max(x, axis=1, keepdims=True).astype(jnp.float32)            # (TN, 1)
    lse = jnp.log(jnp.sum(jnp.exp(x.astype(jnp.float32) - m),
                          axis=1, keepdims=True))                        # (TN, 1)

    # Gather the target-class logit via a one-hot select. The class iota is
    # (1, C) and broadcasting handles the compare against the (TN, 1) targets
    # (avoids a full-tile iota pass on the VPU). Full logp never materialized.
    cls_idx = jax.lax.broadcasted_iota(jnp.int32, (1, n_classes), 1)      # (1, C)
    x_t = jnp.sum(jnp.where(cls_idx == t, x.astype(jnp.float32), 0.0),
                  axis=1, keepdims=True)                                  # (TN, 1)
    logp_t = x_t - m - lse                                                # (TN, 1)

    pt = jnp.exp(logp_t)
    omp = 1.0 - pt
    # eps added to logp_t (exactly as the PyTorch module does).
    f_loss = -ALPHA * (omp * omp) * (logp_t + EPS)                        # (TN, 1)

    # Ragged last tile: zero padded rows with a select (not a multiply), so
    # garbage lanes that happen to be Inf/NaN cannot poison the partial sum.
    row_idx = pid * tile_n + jax.lax.broadcasted_iota(jnp.int32, (tile_n, 1), 0)
    f_loss = jnp.where(row_idx < n_valid, f_loss, 0.0)

    partial = jnp.sum(f_loss)

    # Lane-dense output block: partial sum at [0, 0], zeros elsewhere.
    sub = jax.lax.broadcasted_iota(jnp.int32, (8, 128), 0)
    lane = jax.lax.broadcasted_iota(jnp.int32, (8, 128), 1)
    o_ref[...] = jnp.where((sub == 0) & (lane == 0), partial, 0.0)


def focal_loss(inputs, targets):
    """inputs: (N, C) float logits (f32 or bf16); targets: (N,) int class ids.
    Returns scalar mean focal loss (alpha=1, gamma=2, eps=1e-8)."""
    n, c = inputs.shape
    itemsize = jnp.dtype(inputs.dtype).itemsize

    # Row alignment: 8 rows for f32, 16 for bf16 (sublane packing), 32 for 8-bit.
    row_align = {4: 8, 2: 16, 1: 32}.get(itemsize, 8)

    # VMEM budget per pipeline buffer: logits row is lane-padded to a multiple
    # of 128 physically, and the (tn, 1) int32 targets row is lane-padded to
    # 128 lanes (512 B/row). Target ~4 MiB per buffer, cap at 4096 rows.
    cp_phys = max(128, ((c + 127) // 128) * 128)
    row_bytes = cp_phys * itemsize + 512
    budget_rows = max(row_align,
                      ((4 * 1024 * 1024) // row_bytes) // row_align * row_align)
    n_up = ((n + row_align - 1) // row_align) * row_align
    tn = int(min(4096, budget_rows, n_up))

    # Prefer >= 2 grid steps when N allows so v7x megacore can shard the
    # "parallel" row axis across both TensorCores (no-op on v5e/v6e).
    if tn >= n_up and n_up >= 2 * row_align:
        half = (n_up + 1) // 2
        tn = ((half + row_align - 1) // row_align) * row_align

    num_tiles = pl.cdiv(n, tn)

    # Targets as an (N, 1) int32 column; no row padding (ragged tile is masked
    # in-kernel) and no class padding (block last dim == true C).
    t2d = targets.astype(jnp.int32).reshape(n, 1)

    kernel = functools.partial(
        _focal_loss_kernel, n_valid=n, n_classes=c, tile_n=tn)

    partials = pl.pallas_call(
        kernel,
        out_shape=jax.ShapeDtypeStruct((num_tiles * 8, 128), jnp.float32),
        grid_spec=pltpu.PrefetchScalarGridSpec(
            num_scalar_prefetch=0,
            grid=(num_tiles,),
            in_specs=[
                # Last dim equals the full array dim C (legal even if C % 128 != 0).
                pl.BlockSpec((tn, c), lambda i: (i, 0)),
                pl.BlockSpec((tn, 1), lambda i: (i, 0)),
            ],
            out_specs=pl.BlockSpec((8, 128), lambda i: (i, 0)),
        ),
        compiler_params=pltpu.CompilerParams(
            dimension_semantics=("parallel",),
            vmem_limit_bytes=32 * 1024 * 1024,
        ),
        # TODO(synk): add pipeline_mode=pl.Buffered(3) on the logits spec only
        # if xprof still shows exposed DMA after the pad removal + bigger tiles.
    )(inputs, t2d)

    # Tiny final reduction in plain JAX; divide by the true N ('mean').
    return jnp.sum(partials) / jnp.float32(n)


def focal_loss_ref(inputs, targets):
    # Pure-JAX reference matching the PyTorch module (reduction='mean').
    logp = jax.nn.log_softmax(inputs.astype(jnp.float32), axis=1)
    logp_t = jnp.take_along_axis(
        logp, targets[:, None].astype(jnp.int32), axis=1)[:, 0]
    pt = jnp.exp(logp_t)
    f_loss = -ALPHA * (1.0 - pt) ** GAMMA * (logp_t + EPS)
    return jnp.mean(f_loss)


if __name__ == "__main__":
    key = jax.random.PRNGKey(0)
    k1, k2 = jax.random.split(key)
    N, C = 8, 32
    inputs = jax.random.normal(k1, (N, C), dtype=jnp.float32)
    targets = jax.random.randint(k2, (N,), 0, C, dtype=jnp.int32)

    out = focal_loss(inputs, targets)
    jax.block_until_ready(out)

    ref = focal_loss_ref(inputs, targets)
    assert jnp.allclose(out, ref, atol=1e-5, rtol=1e-5), (out, ref)
    print("KERNEL_OK")
</pallas_src>

<mosaic_0001>
module attributes {stable_mosaic.version = 11 : i64} {
  func.func @_focal_loss_kernel(%arg0: i32, %arg1: memref<8x32xf32, #tpu.memory_space<vmem>>, %arg2: memref<8x1xi32, #tpu.memory_space<vmem>>, %arg3: memref<8x128xf32, #tpu.memory_space<vmem>>) attributes {dimension_semantics = [#tpu.dimension_semantics<parallel>], iteration_bounds = array<i64: 1>, scalar_prefetch = 0 : i64, scratch_operands = 0 : i64, tpu.core_type = #tpu.core_type<tc>, window_params = [{transform_indices = @transform_0, window_bounds = array<i64: 8, 32>}, {transform_indices = @transform_1, window_bounds = array<i64: 8, 1>}, {transform_indices = @transform_2, window_bounds = array<i64: 8, 128>}]} {
    %c0 = arith.constant 0 : index
    %c0_0 = arith.constant 0 : index
    %0 = vector.load %arg2[%c0, %c0_0] : memref<8x1xi32, #tpu.memory_space<vmem>>, vector<8x1xi32>
    %c0_1 = arith.constant 0 : index
    %c0_2 = arith.constant 0 : index
    %1 = vector.load %arg1[%c0_1, %c0_2] : memref<8x32xf32, #tpu.memory_space<vmem>>, vector<8x32xf32>
    %cst = arith.constant dense<0xFF800000> : vector<8xf32>
    %2 = vector.multi_reduction <maximumf>, %1, %cst [1] : vector<8x32xf32> to vector<8xf32>
    %3 = vector.shape_cast %2 : vector<8xf32> to vector<8x1xf32>
    %4 = vector.broadcast %3 : vector<8x1xf32> to vector<8x32xf32>
    %5 = arith.subf %1, %4 : vector<8x32xf32>
    %6 = math.exp %5 : vector<8x32xf32>
    %cst_3 = arith.constant dense<0.000000e+00> : vector<8xf32>
    %7 = vector.multi_reduction <add>, %6, %cst_3 [1] : vector<8x32xf32> to vector<8xf32>
    %8 = vector.shape_cast %7 : vector<8xf32> to vector<8x1xf32>
    %9 = math.log %8 : vector<8x1xf32>
    %10 = tpu.iota {dimensions = array<i32: 1>} : vector<1x32xi32>
    %11 = vector.broadcast %10 : vector<1x32xi32> to vector<8x32xi32>
    %12 = vector.broadcast %0 : vector<8x1xi32> to vector<8x32xi32>
    %13 = arith.cmpi eq, %11, %12 : vector<8x32xi32>
    %cst_4 = arith.constant 0.000000e+00 : f32
    %14 = vector.broadcast %cst_4 : f32 to vector<8x32xf32>
    %15 = arith.select %13, %1, %14 : vector<8x32xi1>, vector<8x32xf32>
    %cst_5 = arith.constant dense<0.000000e+00> : vector<8xf32>
    %16 = vector.multi_reduction <add>, %15, %cst_5 [1] : vector<8x32xf32> to vector<8xf32>
    %17 = vector.shape_cast %16 : vector<8xf32> to vector<8x1xf32>
    %18 = arith.subf %17, %3 : vector<8x1xf32>
    %19 = arith.subf %18, %9 : vector<8x1xf32>
    %20 = math.exp %19 : vector<8x1xf32>
    %cst_6 = arith.constant 1.000000e+00 : f32
    %21 = vector.broadcast %cst_6 : f32 to vector<8x1xf32>
    %22 = arith.subf %21, %20 : vector<8x1xf32>
    %23 = arith.mulf %22, %22 : vector<8x1xf32>
    %cst_7 = arith.constant -1.000000e+00 : f32
    %24 = vector.broadcast %cst_7 : f32 to vector<8x1xf32>
    %25 = arith.mulf %24, %23 : vector<8x1xf32>
    %cst_8 = arith.constant 9.99999993E-9 : f32
    %26 = vector.broadcast %cst_8 : f32 to vector<8x1xf32>
    %27 = arith.addf %19, %26 : vector<8x1xf32>
    %28 = arith.mulf %25, %27 : vector<8x1xf32>
    %c8_i32 = arith.constant 8 : i32
    %29 = arith.muli %arg0, %c8_i32 : i32
    %30 = tpu.iota {dimensions = array<i32: 0>} : vector<8x1xi32>
    %31 = vector.broadcast %29 : i32 to vector<8x1xi32>
    %32 = arith.addi %31, %30 : vector<8x1xi32>
    %c8_i32_9 = arith.constant 8 : i32
    %33 = vector.broadcast %c8_i32_9 : i32 to vector<8x1xi32>
    %34 = arith.cmpi slt, %32, %33 : vector<8x1xi32>
    %cst_10 = arith.constant 0.000000e+00 : f32
    %35 = vector.broadcast %cst_10 : f32 to vector<8x1xf32>
    %36 = arith.select %34, %28, %35 : vector<8x1xi1>, vector<8x1xf32>
    %37 = vector.shape_cast %36 : vector<8x1xf32> to vector<1x8x1xf32>
    %cst_11 = arith.constant dense<0.000000e+00> : vector<1xf32>
    %38 = vector.multi_reduction <add>, %37, %cst_11 [1, 2] : vector<1x8x1xf32> to vector<1xf32>
    %39 = vector.shape_cast %38 : vector<1xf32> to vector<1x1x1xf32>
    %40 = vector.extract %39[0, 0, 0] : f32 from vector<1x1x1xf32>
    %41 = tpu.iota {dimensions = array<i32: 0>} : vector<8x128xi32>
    %42 = tpu.iota {dimensions = array<i32: 1>} : vector<8x128xi32>
    %c0_i32 = arith.constant 0 : i32
    %43 = vector.broadcast %c0_i32 : i32 to vector<8x128xi32>
    %44 = arith.cmpi eq, %41, %43 : vector<8x128xi32>
    %c0_i32_12 = arith.constant 0 : i32
    %45 = vector.broadcast %c0_i32_12 : i32 to vector<8x128xi32>
    %46 = arith.cmpi eq, %42, %45 : vector<8x128xi32>
    %47 = arith.andi %44, %46 : vector<8x128xi1>
    %cst_13 = arith.constant 0.000000e+00 : f32
    %48 = vector.broadcast %40 : f32 to vector<8x128xf32>
    %49 = vector.broadcast %cst_13 : f32 to vector<8x128xf32>
    %50 = arith.select %47, %48, %49 : vector<8x128xi1>, vector<8x128xf32>
    %c0_14 = arith.constant 0 : index
    %c0_15 = arith.constant 0 : index
    %51 = vector.load %arg3[%c0_14, %c0_15] : memref<8x128xf32, #tpu.memory_space<vmem>>, vector<8x128xf32>
    tpu.vector_store %arg3[%c0_14, %c0_15], %50 {strides = array<i32>} : memref<8x128xf32, #tpu.memory_space<vmem>>, vector<8x128xf32>,
    return
  }
  func.func @transform_0(%arg0: i32) -> (i32, i32) {
    %c0_i32 = arith.constant 0 : i32
    %c0_i32_0 = arith.constant 0 : i32
    return %arg0, %c0_i32 : i32, i32
  }
  func.func @transform_1(%arg0: i32) -> (i32, i32) {
    %c0_i32 = arith.constant 0 : i32
    %c0_i32_0 = arith.constant 0 : i32
    return %arg0, %c0_i32 : i32, i32
  }
  func.func @transform_2(%arg0: i32) -> (i32, i32) {
    %c0_i32 = arith.constant 0 : i32
    %c0_i32_0 = arith.constant 0 : i32
    return %arg0, %c0_i32 : i32, i32
  }
}

</mosaic_0001>

<llo_original>
// kernel: tpu_custom_call.1
$region0: #{tpu_custom_call.1}
  #allocation0 [shape = 'u32[]', space=smem, size = 0x4, offset = 0x4, fixed_abs, tag = 'smem constant byte address 0x4 - core index']
  #allocation1 [shape = 'u32[144,128]{1,0:T(1,128)}', space=vmem, size = 0x12000, scoped, tag = 'internal scratch']
  %s0 = inlined_call_operand.vmem [shape: f32[8,32], index: 0, kind: input, shape index: {}]
  %s1 = inlined_call_operand.vmem [shape: s32[8,1], index: 1, kind: input, shape index: {}]
  %s2 = inlined_call_operand.hbm [shape: f32[8,128], index: 2, kind: output, shape index: {}]
  %s3 = sld [smem:[#allocation0]]
  $region18: #{tpu_custom_call.1} parent=0
    _
  %s5 = ssub.s32 1, %s3
  %s6 = scalar_select 0, %s5, %s3
  $region1: #{tpu_custom_call.1} parent=0
    #allocation2 [shape = 'u8[4096]{0}', space=vmem, size = 0x1000, scoped, tag = 'output window, operand 0, single buffered']
    #allocation3 [shape = 's32[1]{0}', space=sflag, size = 0x4, scoped, tag = 'scoped memory for tpu_custom_call.1']
    %7 = vsyncpa [#allocation3], 0
    // Predicated region
    $region2: #{tpu_custom_call.1} parent=1 // pred_check
      _
    $region3: #{tpu_custom_call.1} parent=1 // pred_check_branch
      %9 = sbr.rel (0) target = $region5
    $region4: #{tpu_custom_call.1} parent=1 // pred_region
      _
    $region5: #{tpu_custom_call.1} parent=1 // pred_fallthru
      _
    // Predicated region
    $region6: #{tpu_custom_call.1} parent=1 // pred_check
      _
    $region7: #{tpu_custom_call.1} parent=1 // pred_check_branch
      %11 = sbr.rel (0) target = $region9
    $region8: #{tpu_custom_call.1} parent=1 // pred_region
      _
    $region9: #{tpu_custom_call.1} parent=1 // pred_fallthru
      _
    %v12 = vld [vmem:[%s1] sm:$0xff]
    %v13 = vld [vmem:[%s0] sm:$0xff]
    %vm14 = vcmask 261120
    %v15 = vsel %vm14, %v13, -inf
    %16 = vmax.xlane.f32.xlu0 %v15
    %v17 = vpop.xlane.xlu0 %16
    %v18 = vsub.f32 %v13, %v17
    %v19 = vmul.f32 %v18, 1.442695
    %v20 = vpow.pop %v19
    %v21 = vsel %vm14, %v20, 0.0
    %22 = vadd.xlane.f32.xlu0 %v21
    %v23 = vpop.xlane.xlu0 %22
    %v24 = vlog2.pop %v23
    %v25 = vmul.f32 %v24, 0.6931472
    %v26 = vlaneseq
    %v27 = vand.u32 %v26, 127
    %28 = vset.pattern.permute.xlu0 0
    %29 = vperm.xlu0 %28, %v12
    %v30 = vpop.permute.xlu0 %29
    %vm31 = vcmp.eq.s32.totalorder %v27, %v30
    %v32 = vsel %vm31, %v13, 0.0
    %v33 = vsel %vm14, %v32, 0.0
    %34 = vadd.xlane.f32.xlu0 %v33
    %v35 = vpop.xlane.xlu0 %34
    %v36 = vsub.f32 %v35, %v17
    %v37 = vsub.f32 %v36, %v25
    %v38 = vmul.f32 %v37, 1.442695
    %v39 = vpow.pop %v38
    %v40 = vsub.f32 1.0, %v39
    %v41 = vmul.f32 %v40, %v40
    %v42 = vmul.f32 %v41, -1.0
    %v43 = vadd.f32 %v37, 1e-08
    %v44 = vmul.f32 %v42, %v43
    %s45 = smul.u32 0, 8
    %v46 = vlaneseq
    %v47 = vshrl.u32 %v46, 7
    %v48 = vstv %s45
    %v49 = vadd.s32 %v48, %v47
    %vm50 = vcmp.lt.s32.totalorder %v49, 8
    %v51 = vsel %vm50, %v44, 0.0
    %vm52 = vcmask 7168
    %v53 = vsel %vm52, %v51, 0.0
    %54 = vadd.xlane.f32.xlu0 %v53
    %v55 = vpop.xlane.xlu0 %54
    %v56 = vrot.slane %v55, 4
    %v57 = vadd.f32 %v55, %v56
    %v58 = vrot.slane %v57, 2
    %v59 = vadd.f32 %v57, %v58
    %v60 = vrot.slane %v59, 1
    %v61 = vadd.f32 %v59, %v60
    %s62 = vtos %v61
    %vm63 = vcmp.eq.s32.totalorder %v47, 0
    %vm64 = vcmp.eq.s32.totalorder %v27, 0
    %vm65 = vmand %vm63, %vm64
    %v66 = vstv %s62
    %v67 = vsel %vm65, %v66, 0.0
    %68 = vst [vmem:[#allocation2] sm:$0xff] %v67
    // Predicated region
    $region10: #{tpu_custom_call.1} parent=1 // pred_check
      _
    $region11: #{tpu_custom_call.1} parent=1 // pred_check_branch
      %70 = sbr.rel (0) target = $region13
    $region12: #{tpu_custom_call.1} parent=1 // pred_region
      %s72 = ssub.s32 128, 128
      %73 = vsyncadd [#allocation3], %s72
      %s75 = sshll.u32 [#allocation2], 4
      %s76 = int_to_ptr.vmem [resolvable:$true] %s75
      %78 = dma.vmem_to_hbm [thread:$0]  %s76, 128, %s2, [#allocation3]
    $region13: #{tpu_custom_call.1} parent=1 // pred_fallthru
      _
    // Predicated region
    $region14: #{tpu_custom_call.1} parent=1 // pred_check
      _
    $region15: #{tpu_custom_call.1} parent=1 // pred_check_branch
      %80 = sbr.rel (0) target = $region17
    $region16: #{tpu_custom_call.1} parent=1 // pred_region
      %81 = dma.done [#allocation3], 128
    $region17: #{tpu_custom_call.1} parent=1 // pred_fallthru
      _
    %82 = vsyncpa [#allocation3], 1

</llo_original>
